<compile_context>
chip_gen: v5e
topology: v5e:2x2
jax: 0.10.0
libtpu: 0.0.40
codegen_flags: <defaults>
</compile_context>

<pallas_src>
import functools

import jax
import jax.numpy as jnp
from jax import lax
from jax.experimental import pallas as pl
from jax.experimental.pallas import tpu as pltpu


def _dice_partial_kernel(x_ref, y_ref, dsc_ref, xacc, iacc, yacc, *,
                         eps: float, total_t: int, lanes: int, mask_tail: bool):
    # x_ref: (Bt, C, Tt) scores (native dtype), y_ref: (Bt, Tt) int32 labels,
    # dsc_ref: (Bt, C) f32 dice coefficients (written once, on the last T step),
    # xacc/iacc/yacc: (Bt, C, lanes) f32 running partial sums.
    t = pl.program_id(1)

    @pl.when(t == 0)
    def _():
        xacc[...] = jnp.zeros_like(xacc)
        iacc[...] = jnp.zeros_like(iacc)
        yacc[...] = jnp.zeros_like(yacc)

    x = x_ref[...].astype(jnp.float32)                 # (Bt, C, Tt) f32 in-register
    y = y_ref[...]                                     # (Bt, Tt)   int32
    Bt, C, Tt = x_ref.shape

    # One-hot as a boolean compare against a small (1, C, 1) class iota;
    # no (B, C, T) f32 one-hot temporary is materialized.
    cls = lax.broadcasted_iota(jnp.int32, (1, C, 1), 1)
    sel = y[:, None, :] == cls                         # (Bt, C, Tt) bool

    if mask_tail:
        # Last T tile overruns the array: mask the padding lanes.
        lane = lax.broadcasted_iota(jnp.int32, (1, Tt), 1)
        valid = (lane + t * Tt) < total_t              # (1, Tt)
        v3 = valid[:, None, :]                         # (1, 1, Tt)
        x = jnp.where(v3, x, 0.0)
        sel = jnp.logical_and(sel, v3)

    # Two-stage reduction: fold the Tt lanes into `lanes` (=128 when Tt is a
    # multiple of 128) with VPU adds on tile-aligned static slices; the
    # cross-lane (XLU) reduce happens only once, in the finalize below.
    n_folds = Tt // lanes
    xk = x[:, :, :lanes]
    sk = sel[:, :, :lanes]
    px = xk
    pi = jnp.where(sk, xk, 0.0)
    py = sk.astype(jnp.float32)
    for k in range(1, n_folds):
        lo = k * lanes
        xk = x[:, :, lo:lo + lanes]
        sk = sel[:, :, lo:lo + lanes]
        px = px + xk
        pi = pi + jnp.where(sk, xk, 0.0)
        py = py + sk.astype(jnp.float32)

    xacc[...] += px
    iacc[...] += pi
    yacc[...] += py

    @pl.when(t == pl.num_programs(1) - 1)
    def _():
        sum_x = jnp.sum(xacc[...], axis=-1)            # (Bt, C)
        inter = jnp.sum(iacc[...], axis=-1)            # (Bt, C)
        sum_y = jnp.sum(yacc[...], axis=-1)            # (Bt, C)
        dsc_ref[...] = 2.0 * inter / (sum_x + sum_y + jnp.float32(eps))


def _choose_tiles(B: int, C: int, T: int, itemsize: int):
    # Batch tile: multiple of 8 (sublane constraint on y / output) or full B.
    Bt = B
    for cand in (32, 16, 8):
        if B % cand == 0:
            Bt = cand
            break
    # T tile: full T if it fits a ~2 MiB x-block budget (so the double-buffered
    # pipeline stays well inside v5e's 16 MiB scoped VMEM), else a multiple of 128.
    budget = 2 * 1024 * 1024
    cap = max(128, (budget // max(1, Bt * C * itemsize)) // 128 * 128)
    Tt = T if T <= cap else cap
    return Bt, Tt


def dice_loss_1d(x: jax.Array, y: jax.Array, eps: float = 1e-8,
                 ignore_cl0: bool = True, *, block_b: int | None = None,
                 block_t: int | None = None) -> jax.Array:
    """x: (B, C, T) scores (any float dtype), y: (B, T) int labels. Scalar loss."""
    B, C, T = x.shape
    if ignore_cl0 and C < 2:
        raise ValueError("ignore_cl0=True requires at least 2 classes (C >= 2).")
    # TODO(synk): per-class `weights` path not implemented (module default is
    # weights=None; the reference weighted branch is also buggy upstream).

    itemsize = jnp.dtype(x.dtype).itemsize
    Bt, Tt = _choose_tiles(B, C, T, itemsize)
    if block_b is not None:
        Bt = block_b
    if block_t is not None:
        Tt = min(block_t, T)
    if B % Bt != 0 or not (Bt % 8 == 0 or Bt == B):
        raise ValueError(f"bad batch tile {Bt} for B={B}")
    if Tt != T and Tt % 128 != 0:
        raise ValueError(f"bad T tile {Tt} for T={T}")

    lanes = 128 if Tt % 128 == 0 else Tt
    mask_tail = (T % Tt) != 0
    num_b = B // Bt
    num_t = (T + Tt - 1) // Tt

    kernel = functools.partial(_dice_partial_kernel, eps=eps, total_t=T,
                               lanes=lanes, mask_tail=mask_tail)

    dsc = pl.pallas_call(
        kernel,
        out_shape=jax.ShapeDtypeStruct((B, C), jnp.float32),
        grid_spec=pltpu.PrefetchScalarGridSpec(
            num_scalar_prefetch=0,
            grid=(num_b, num_t),                       # reduction axis (T) last
            in_specs=[
                pl.BlockSpec((Bt, C, Tt), lambda b, t: (b, 0, t)),
                pl.BlockSpec((Bt, Tt), lambda b, t: (b, t)),
            ],
            out_specs=pl.BlockSpec((Bt, C), lambda b, t: (b, 0)),
            scratch_shapes=[
                pltpu.VMEM((Bt, C, lanes), jnp.float32),
                pltpu.VMEM((Bt, C, lanes), jnp.float32),
                pltpu.VMEM((Bt, C, lanes), jnp.float32),
            ],
        ),
        compiler_params=pltpu.CompilerParams(
            dimension_semantics=("parallel", "arbitrary"),
            vmem_limit_bytes=32 * 1024 * 1024,
        ),
        cost_estimate=pl.CostEstimate(
            flops=6 * B * C * T,
            transcendentals=0,
            bytes_accessed=B * C * T * itemsize + B * T * 4 + B * C * 4,
        ),
    )(x, y.astype(jnp.int32))                          # no wrapper-side f32 upcast of x

    # Tiny (B, C) finalize in plain JAX: masked mean + "1 - mean".
    if ignore_cl0:
        dsc = dsc[:, 1:]
    return 1.0 - jnp.mean(dsc)


def _reference_dice_loss(x, y, eps=1e-8, ignore_cl0=True):
    # Pure-JAX re-statement of the PyTorch forward, for a sanity check.
    xp = jnp.transpose(x, (0, 2, 1)).astype(jnp.float32)   # (B, T, C)
    nc = xp.shape[-1]
    yoh = jax.nn.one_hot(y, nc, dtype=xp.dtype)             # (B, T, C)
    if ignore_cl0:
        xp, yoh = xp[..., 1:], yoh[..., 1:]
    dsc = 2 * (xp * yoh).sum(axis=1) / (xp.sum(axis=1) + yoh.sum(axis=1) + eps)
    return 1.0 - dsc.mean()


if __name__ == "__main__":
    key = jax.random.PRNGKey(0)
    kx, ky = jax.random.split(key)

    # Small shapes consistent with the module: (batch=2, class=4, t=16).
    B, C, T = 2, 4, 16
    logits = jax.random.normal(kx, (B, C, T), dtype=jnp.float32)
    x = jax.nn.softmax(logits, axis=1)
    y = jax.random.randint(ky, (B, T), 0, C, dtype=jnp.int32)

    loss = dice_loss_1d(x, y)
    jax.block_until_ready(loss)
    ref = _reference_dice_loss(x, y)
    assert jnp.allclose(loss, ref, atol=1e-5, rtol=1e-5), (loss, ref)

    # Second check exercising the tiled / tail-masked reduction path
    # (forced 128-lane T tiles with T=300 -> 3 T steps, 44 valid tail lanes).
    B2, C2, T2 = 8, 5, 300
    k2x, k2y = jax.random.split(jax.random.PRNGKey(0))
    x2 = jax.nn.softmax(jax.random.normal(k2x, (B2, C2, T2), jnp.float32), axis=1)
    y2 = jax.random.randint(k2y, (B2, T2), 0, C2, dtype=jnp.int32)
    loss2 = dice_loss_1d(x2, y2, block_t=128)
    jax.block_until_ready(loss2)
    ref2 = _reference_dice_loss(x2, y2)
    assert jnp.allclose(loss2, ref2, atol=1e-5, rtol=1e-5), (loss2, ref2)

    print("KERNEL_OK")
</pallas_src>

<mosaic_0001>
module attributes {stable_mosaic.version = 11 : i64} {
  func.func @_dice_partial_kernel(%arg0: i32, %arg1: i32, %arg2: memref<2x4x16xf32, #tpu.memory_space<vmem>>, %arg3: memref<2x16xi32, #tpu.memory_space<vmem>>, %arg4: memref<2x4xf32, #tpu.memory_space<vmem>>, %arg5: memref<2x4x16xf32, #tpu.memory_space<vmem>>, %arg6: memref<2x4x16xf32, #tpu.memory_space<vmem>>, %arg7: memref<2x4x16xf32, #tpu.memory_space<vmem>>) attributes {dimension_semantics = [#tpu.dimension_semantics<parallel>, #tpu.dimension_semantics<arbitrary>], iteration_bounds = array<i64: 1, 1>, scalar_prefetch = 0 : i64, scratch_operands = 3 : i64, tpu.core_type = #tpu.core_type<tc>, window_params = [{transform_indices = @transform_0, window_bounds = array<i64: 2, 4, 16>}, {transform_indices = @transform_1, window_bounds = array<i64: 2, 16>}, {transform_indices = @transform_2, window_bounds = array<i64: 2, 4>}]} {
    %c0_i32 = arith.constant 0 : i32
    %0 = arith.cmpi eq, %arg1, %c0_i32 : i32
    %1 = arith.extui %0 : i1 to i32
    %c0_i32_0 = arith.constant 0 : i32
    %2 = arith.cmpi ne, %1, %c0_i32_0 : i32
    scf.if %2 {
      %cst_25 = arith.constant 0.000000e+00 : f32
      %26 = vector.broadcast %cst_25 : f32 to vector<2x4x16xf32>
      %c0_26 = arith.constant 0 : index
      %c0_27 = arith.constant 0 : index
      %c0_28 = arith.constant 0 : index
      %27 = vector.load %arg5[%c0_26, %c0_27, %c0_28] : memref<2x4x16xf32, #tpu.memory_space<vmem>>, vector<2x4x16xf32>
      tpu.vector_store %arg5[%c0_26, %c0_27, %c0_28], %26 {strides = array<i32>} : memref<2x4x16xf32, #tpu.memory_space<vmem>>, vector<2x4x16xf32>,
      %cst_29 = arith.constant 0.000000e+00 : f32
      %28 = vector.broadcast %cst_29 : f32 to vector<2x4x16xf32>
      %c0_30 = arith.constant 0 : index
      %c0_31 = arith.constant 0 : index
      %c0_32 = arith.constant 0 : index
      %29 = vector.load %arg6[%c0_30, %c0_31, %c0_32] : memref<2x4x16xf32, #tpu.memory_space<vmem>>, vector<2x4x16xf32>
      tpu.vector_store %arg6[%c0_30, %c0_31, %c0_32], %28 {strides = array<i32>} : memref<2x4x16xf32, #tpu.memory_space<vmem>>, vector<2x4x16xf32>,
      %cst_33 = arith.constant 0.000000e+00 : f32
      %30 = vector.broadcast %cst_33 : f32 to vector<2x4x16xf32>
      %c0_34 = arith.constant 0 : index
      %c0_35 = arith.constant 0 : index
      %c0_36 = arith.constant 0 : index
      %31 = vector.load %arg7[%c0_34, %c0_35, %c0_36] : memref<2x4x16xf32, #tpu.memory_space<vmem>>, vector<2x4x16xf32>
      tpu.vector_store %arg7[%c0_34, %c0_35, %c0_36], %30 {strides = array<i32>} : memref<2x4x16xf32, #tpu.memory_space<vmem>>, vector<2x4x16xf32>,
    } else {
    }
    %c0 = arith.constant 0 : index
    %c0_1 = arith.constant 0 : index
    %c0_2 = arith.constant 0 : index
    %3 = vector.load %arg2[%c0, %c0_1, %c0_2] : memref<2x4x16xf32, #tpu.memory_space<vmem>>, vector<2x4x16xf32>
    %c0_3 = arith.constant 0 : index
    %c0_4 = arith.constant 0 : index
    %4 = vector.load %arg3[%c0_3, %c0_4] : memref<2x16xi32, #tpu.memory_space<vmem>>, vector<2x16xi32>
    %5 = tpu.iota {dimensions = array<i32: 1>} : vector<1x4x1xi32>
    %6 = vector.shape_cast %4 : vector<2x16xi32> to vector<2x1x16xi32>
    %7 = vector.broadcast %6 : vector<2x1x16xi32> to vector<2x4x16xi32>
    %8 = vector.broadcast %5 : vector<1x4x1xi32> to vector<2x4x16xi32>
    %9 = arith.cmpi eq, %7, %8 : vector<2x4x16xi32>
    %cst = arith.constant 0.000000e+00 : f32
    %10 = vector.broadcast %cst : f32 to vector<2x4x16xf32>
    %11 = arith.select %9, %3, %10 : vector<2x4x16xi1>, vector<2x4x16xf32>
    %12 = arith.extui %9 : vector<2x4x16xi1> to vector<2x4x16xi32>
    %13 = arith.sitofp %12 : vector<2x4x16xi32> to vector<2x4x16xf32>
    %c0_5 = arith.constant 0 : index
    %c0_6 = arith.constant 0 : index
    %c0_7 = arith.constant 0 : index
    %14 = vector.load %arg5[%c0_5, %c0_6, %c0_7] : memref<2x4x16xf32, #tpu.memory_space<vmem>>, vector<2x4x16xf32>
    %15 = arith.addf %14, %3 : vector<2x4x16xf32>
    %c0_8 = arith.constant 0 : index
    %c0_9 = arith.constant 0 : index
    %c0_10 = arith.constant 0 : index
    %16 = vector.load %arg5[%c0_8, %c0_9, %c0_10] : memref<2x4x16xf32, #tpu.memory_space<vmem>>, vector<2x4x16xf32>
    tpu.vector_store %arg5[%c0_8, %c0_9, %c0_10], %15 {strides = array<i32>} : memref<2x4x16xf32, #tpu.memory_space<vmem>>, vector<2x4x16xf32>,
    %c0_11 = arith.constant 0 : index
    %c0_12 = arith.constant 0 : index
    %c0_13 = arith.constant 0 : index
    %17 = vector.load %arg6[%c0_11, %c0_12, %c0_13] : memref<2x4x16xf32, #tpu.memory_space<vmem>>, vector<2x4x16xf32>
    %18 = arith.addf %17, %11 : vector<2x4x16xf32>
    %c0_14 = arith.constant 0 : index
    %c0_15 = arith.constant 0 : index
    %c0_16 = arith.constant 0 : index
    %19 = vector.load %arg6[%c0_14, %c0_15, %c0_16] : memref<2x4x16xf32, #tpu.memory_space<vmem>>, vector<2x4x16xf32>
    tpu.vector_store %arg6[%c0_14, %c0_15, %c0_16], %18 {strides = array<i32>} : memref<2x4x16xf32, #tpu.memory_space<vmem>>, vector<2x4x16xf32>,
    %c0_17 = arith.constant 0 : index
    %c0_18 = arith.constant 0 : index
    %c0_19 = arith.constant 0 : index
    %20 = vector.load %arg7[%c0_17, %c0_18, %c0_19] : memref<2x4x16xf32, #tpu.memory_space<vmem>>, vector<2x4x16xf32>
    %21 = arith.addf %20, %13 : vector<2x4x16xf32>
    %c0_20 = arith.constant 0 : index
    %c0_21 = arith.constant 0 : index
    %c0_22 = arith.constant 0 : index
    %22 = vector.load %arg7[%c0_20, %c0_21, %c0_22] : memref<2x4x16xf32, #tpu.memory_space<vmem>>, vector<2x4x16xf32>
    tpu.vector_store %arg7[%c0_20, %c0_21, %c0_22], %21 {strides = array<i32>} : memref<2x4x16xf32, #tpu.memory_space<vmem>>, vector<2x4x16xf32>,
    %c0_i32_23 = arith.constant 0 : i32
    %23 = arith.cmpi eq, %arg1, %c0_i32_23 : i32
    %24 = arith.extui %23 : i1 to i32
    %c0_i32_24 = arith.constant 0 : i32
    %25 = arith.cmpi ne, %24, %c0_i32_24 : i32
    scf.if %25 {
      %c0_25 = arith.constant 0 : index
      %c0_26 = arith.constant 0 : index
      %c0_27 = arith.constant 0 : index
      %26 = vector.load %arg5[%c0_25, %c0_26, %c0_27] : memref<2x4x16xf32, #tpu.memory_space<vmem>>, vector<2x4x16xf32>
      %cst_28 = arith.constant dense<0.000000e+00> : vector<2x4xf32>
      %27 = vector.multi_reduction <add>, %26, %cst_28 [2] : vector<2x4x16xf32> to vector<2x4xf32>
      %c0_29 = arith.constant 0 : index
      %c0_30 = arith.constant 0 : index
      %c0_31 = arith.constant 0 : index
      %28 = vector.load %arg6[%c0_29, %c0_30, %c0_31] : memref<2x4x16xf32, #tpu.memory_space<vmem>>, vector<2x4x16xf32>
      %cst_32 = arith.constant dense<0.000000e+00> : vector<2x4xf32>
      %29 = vector.multi_reduction <add>, %28, %cst_32 [2] : vector<2x4x16xf32> to vector<2x4xf32>
      %c0_33 = arith.constant 0 : index
      %c0_34 = arith.constant 0 : index
      %c0_35 = arith.constant 0 : index
      %30 = vector.load %arg7[%c0_33, %c0_34, %c0_35] : memref<2x4x16xf32, #tpu.memory_space<vmem>>, vector<2x4x16xf32>
      %cst_36 = arith.constant dense<0.000000e+00> : vector<2x4xf32>
      %31 = vector.multi_reduction <add>, %30, %cst_36 [2] : vector<2x4x16xf32> to vector<2x4xf32>
      %cst_37 = arith.constant 2.000000e+00 : f32
      %32 = vector.broadcast %cst_37 : f32 to vector<2x4xf32>
      %33 = arith.mulf %32, %29 : vector<2x4xf32>
      %34 = arith.addf %27, %31 : vector<2x4xf32>
      %cst_38 = arith.constant 9.99999993E-9 : f32
      %35 = vector.broadcast %cst_38 : f32 to vector<2x4xf32>
      %36 = arith.addf %34, %35 : vector<2x4xf32>
      %37 = arith.divf %33, %36 : vector<2x4xf32>
      %c0_39 = arith.constant 0 : index
      %c0_40 = arith.constant 0 : index
      %38 = vector.load %arg4[%c0_39, %c0_40] : memref<2x4xf32, #tpu.memory_space<vmem>>, vector<2x4xf32>
      tpu.vector_store %arg4[%c0_39, %c0_40], %37 {strides = array<i32>} : memref<2x4xf32, #tpu.memory_space<vmem>>, vector<2x4xf32>,
    } else {
    }
    return
  }
  func.func @transform_0(%arg0: i32, %arg1: i32) -> (i32, i32, i32) {
    %c0_i32 = arith.constant 0 : i32
    %c0_i32_0 = arith.constant 0 : i32
    return %arg0, %c0_i32, %arg1 : i32, i32, i32
  }
  func.func @transform_1(%arg0: i32, %arg1: i32) -> (i32, i32) {
    %c0_i32 = arith.constant 0 : i32
    return %arg0, %arg1 : i32, i32
  }
  func.func @transform_2(%arg0: i32, %arg1: i32) -> (i32, i32) {
    %c0_i32 = arith.constant 0 : i32
    %c0_i32_0 = arith.constant 0 : i32
    return %arg0, %c0_i32 : i32, i32
  }
}

</mosaic_0001>

<llo_original>
// kernel: tpu_custom_call.1
$region0: #{tpu_custom_call.1}
  #allocation0 [shape = 'u32[]', space=smem, size = 0x4, offset = 0x4, fixed_abs, tag = 'smem constant byte address 0x4 - core index']
  #allocation1 [shape = 'u32[72,128]{1,0:T(1,128)}', space=vmem, size = 0x9000, scoped, tag = 'internal scratch']
  #allocation2 [shape = 'f32[2,4,16]{2,1,0:T(4,128)}', space=vmem, size = 0x1000, scoped, tag = 'scratch operand']
  #allocation3 [shape = 'f32[2,4,16]{2,1,0:T(4,128)}', space=vmem, size = 0x1000, scoped, tag = 'scratch operand']
  #allocation4 [shape = 'f32[2,4,16]{2,1,0:T(4,128)}', space=vmem, size = 0x1000, scoped, tag = 'scratch operand']
  %s0 = inlined_call_operand.hbm [shape: f32[2,4,16], index: 0, kind: input, shape index: {}]
  %s1 = inlined_call_operand.hbm [shape: s32[2,16], index: 1, kind: input, shape index: {}]
  %s2 = inlined_call_operand.hbm [shape: f32[2,4], index: 2, kind: output, shape index: {}]
  %s3 = sld [smem:[#allocation0]]
  $region34: #{tpu_custom_call.1} parent=0
    _
  %s5 = ssub.s32 1, %s3
  %s6 = scalar_select 0, %s5, %s3
  $region1: #{tpu_custom_call.1} parent=0
    #allocation5 [shape = 'u8[4096]{0}', space=vmem, size = 0x1000, scoped, tag = 'input window, operand 0, single buffered']
    #allocation6 [shape = 's32[1]{0}', space=sflag, size = 0x4, scoped, tag = 'scoped memory for tpu_custom_call.1']
    #allocation7 [shape = 's32[1]{0}', space=sflag, size = 0x4, scoped, tag = 'scoped memory for tpu_custom_call.1']
    #allocation8 [shape = 'u8[1024]{0}', space=vmem, size = 0x400, scoped, tag = 'input window, operand 1, single buffered']
    #allocation9 [shape = 's32[1]{0}', space=sflag, size = 0x4, scoped, tag = 'scoped memory for tpu_custom_call.1']
    #allocation10 [shape = 'u8[1024]{0}', space=vmem, size = 0x400, scoped, tag = 'output window, operand 0, single buffered']
    %7 = vsyncpa [#allocation6], 0
    %8 = vsyncpa [#allocation9], 0
    %9 = vsyncpa [#allocation7], 0
    // Predicated region
    $region2: #{tpu_custom_call.1} parent=1 // pred_check
      _
    $region3: #{tpu_custom_call.1} parent=1 // pred_check_branch
      %11 = sbr.rel (0) target = $region5
    $region4: #{tpu_custom_call.1} parent=1 // pred_region
      %13 = vsyncadd [#allocation6], 0
      %s14 = sshll.u32 %s0, 4
      %s15 = int_to_ptr.hbm [resolvable:$true] %s14
      %s16 = sshll.u32 [#allocation5], 4
      %s17 = int_to_ptr.vmem [resolvable:$true] %s16
      %22 = dma.hbm_to_vmem [thread:$0]  %s15, 128, %s17, [#allocation6], 64, 64, 4
    $region5: #{tpu_custom_call.1} parent=1 // pred_fallthru
      _
    // Predicated region
    $region6: #{tpu_custom_call.1} parent=1 // pred_check
      _
    $region7: #{tpu_custom_call.1} parent=1 // pred_check_branch
      %24 = sbr.rel (0) target = $region9
    $region8: #{tpu_custom_call.1} parent=1 // pred_region
      %26 = vsyncadd [#allocation9], 0
      %s28 = sshll.u32 %s1, 4
      %s29 = int_to_ptr.hbm [resolvable:$true] %s28
      %s30 = sshll.u32 [#allocation8], 4
      %s31 = int_to_ptr.vmem [resolvable:$true] %s30
      %33 = dma.hbm_to_vmem [thread:$0]  %s29, 32, %s31, [#allocation9]
    $region9: #{tpu_custom_call.1} parent=1 // pred_fallthru
      _
    // Predicated region
    $region10: #{tpu_custom_call.1} parent=1 // pred_check
      _
    $region11: #{tpu_custom_call.1} parent=1 // pred_check_branch
      %35 = sbr.rel (0) target = $region13
    $region12: #{tpu_custom_call.1} parent=1 // pred_region
      %37 = dma.done [#allocation6], 128
    $region13: #{tpu_custom_call.1} parent=1 // pred_fallthru
      _
    // Predicated region
    $region14: #{tpu_custom_call.1} parent=1 // pred_check
      _
    $region15: #{tpu_custom_call.1} parent=1 // pred_check_branch
      %39 = sbr.rel (0) target = $region17
    $region16: #{tpu_custom_call.1} parent=1 // pred_region
      %41 = dma.done [#allocation9], 32
    $region17: #{tpu_custom_call.1} parent=1 // pred_fallthru
      _
    %p42 = scmp.eq.s32.totalorder 0, 0
    // Predicated region
    $region18: #{tpu_custom_call.1} parent=1 // pred_check
      %p43 = pneg %p42
    $region19: #{tpu_custom_call.1} parent=1 // pred_check_branch
      %45 = sbr.rel (%p43) target = $region21
    $region20: #{tpu_custom_call.1} parent=1 // pred_region
      %vm46 = vcmask 125952
      %47 = vst.msk [vmem:[#allocation2] sm:$0xf] %vm46, 0.0
      %48 = vst.msk [vmem:[#allocation2 + $0x4] sm:$0xf] %vm46, 0.0
      %49 = vst.msk [vmem:[#allocation3] sm:$0xf] %vm46, 0.0
      %50 = vst.msk [vmem:[#allocation3 + $0x4] sm:$0xf] %vm46, 0.0
      %51 = vst.msk [vmem:[#allocation4] sm:$0xf] %vm46, 0.0
      %52 = vst.msk [vmem:[#allocation4 + $0x4] sm:$0xf] %vm46, 0.0
    $region21: #{tpu_custom_call.1} parent=1 // pred_fallthru
      _
    %v53 = vld [vmem:[#allocation5] sm:$0xf]
    %v54 = vld [vmem:[#allocation5 + $0x4] sm:$0xf]
    %v55 = vld [vmem:[#allocation8] sm:$0x3]
    %v56 = vlaneseq
    %v57 = vshrl.u32 %v56, 7
    %v58 = vrot.slane %v55, 1
    %v59 = vperm.slane %v55, 0
    %v60 = vperm.slane %v58, 0
    %vm61 = vcmp.eq.s32.totalorder %v59, %v57
    %vm62 = vcmp.eq.s32.totalorder %v60, %v57
    %v63 = vsel %vm61, %v53, 0.0
    %v64 = vsel %vm62, %v54, 0.0
    %v65 = vsel %vm61, 1, 0
    %v66 = vsel %vm62, 1, 0
    %v67 = vcvt.s32.f32 %v65
    %v68 = vcvt.s32.f32 %v66
    %v69 = vld [vmem:[#allocation2] sm:$0xf]
    %v70 = vld [vmem:[#allocation2 + $0x4] sm:$0xf]
    %v71 = vadd.f32 %v69, %v53
    %v72 = vadd.f32 %v70, %v54
    %vm73 = vcmask 125952
    %74 = vst.msk [vmem:[#allocation2] sm:$0xf] %vm73, %v71
    %75 = vst.msk [vmem:[#allocation2 + $0x4] sm:$0xf] %vm73, %v72
    %v76 = vld [vmem:[#allocation3] sm:$0xf]
    %v77 = vld [vmem:[#allocation3 + $0x4] sm:$0xf]
    %v78 = vadd.f32 %v76, %v63
    %v79 = vadd.f32 %v77, %v64
    %80 = vst.msk [vmem:[#allocation3] sm:$0xf] %vm73, %v78
    %81 = vst.msk [vmem:[#allocation3 + $0x4] sm:$0xf] %vm73, %v79
    %v82 = vld [vmem:[#allocation4] sm:$0xf]
    %v83 = vld [vmem:[#allocation4 + $0x4] sm:$0xf]
    %v84 = vadd.f32 %v82, %v67
    %v85 = vadd.f32 %v83, %v68
    %86 = vst.msk [vmem:[#allocation4] sm:$0xf] %vm73, %v84
    %87 = vst.msk [vmem:[#allocation4 + $0x4] sm:$0xf] %vm73, %v85
    // Predicated region
    $region22: #{tpu_custom_call.1} parent=1 // pred_check
      %p88 = pneg %p42
    $region23: #{tpu_custom_call.1} parent=1 // pred_check_branch
      %90 = sbr.rel (%p88) target = $region25
    $region24: #{tpu_custom_call.1} parent=1 // pred_region
      %v91 = vld [vmem:[#allocation2] sm:$0xf]
      %v92 = vld [vmem:[#allocation2 + $0x4] sm:$0xf]
      %v93 = vsel %vm73, %v91, 0.0
      %94 = vadd.xlane.f32.xlu0 %v93
      %v95 = vpop.xlane.xlu0 %94
      %v96 = vsel %vm73, %v92, 0.0
      %97 = vadd.xlane.f32.xlu0 %v96
      %v98 = vpop.xlane.xlu0 %97
      %v99 = vld [vmem:[#allocation3] sm:$0xf]
      %v100 = vld [vmem:[#allocation3 + $0x4] sm:$0xf]
      %v101 = vsel %vm73, %v99, 0.0
      %102 = vadd.xlane.f32.xlu0 %v101
      %v103 = vpop.xlane.xlu0 %102
      %v104 = vsel %vm73, %v100, 0.0
      %105 = vadd.xlane.f32.xlu0 %v104
      %v106 = vpop.xlane.xlu0 %105
      %v107 = vld [vmem:[#allocation4] sm:$0xf]
      %v108 = vld [vmem:[#allocation4 + $0x4] sm:$0xf]
      %v109 = vsel %vm73, %v107, 0.0
      %110 = vadd.xlane.f32.xlu0 %v109
      %v111 = vpop.xlane.xlu0 %110
      %v112 = vsel %vm73, %v108, 0.0
      %113 = vadd.xlane.f32.xlu0 %v112
      %v114 = vpop.xlane.xlu0 %113
      %v115 = vmul.f32 %v103, 2.0
      %v116 = vmul.f32 %v106, 2.0
      %v117 = vadd.f32 %v95, %v111
      %v118 = vadd.f32 %v98, %v114
      %v119 = vadd.f32 %v117, 1e-08
      %v120 = vadd.f32 %v118, 1e-08
      %v121 = vrcp.pop %v119
      %v122 = vmul.f32 %v119, %v121
      %v123 = vsub.f32 1.0, %v122
      %v124 = vmul.f32 %v121, %v123
      %v125 = vadd.f32 %v121, %v124
      %vm126 = vweird.f32 %v119
      %vm127 = vweird.f32 %v121
      %vm128 = vmor %vm126, %vm127
      %v129 = vsel %vm128, %v121, %v125
      %v130 = vand.u32 2147483647, %v119
      %vm131 = vcmp.eq.f32.partialorder %v130, 8.507059e+37
      %v132 = vand.u32 %v119, 2147483648
      %v133 = vor.u32 1.1754944e-38, %v132
      %v134 = vsel %vm131, %v133, %v129
      %v135 = vmul.f32 %v115, %v134
      %v136 = vrcp.pop %v120
      %v137 = vmul.f32 %v120, %v136
      %v138 = vsub.f32 1.0, %v137
      %v139 = vmul.f32 %v136, %v138
      %v140 = vadd.f32 %v136, %v139
      %vm141 = vweird.f32 %v120
      %vm142 = vweird.f32 %v136
      %vm143 = vmor %vm141, %vm142
      %v144 = vsel %vm143, %v136, %v140
      %v145 = vand.u32 2147483647, %v120
      %vm146 = vcmp.eq.f32.partialorder %v145, 8.507059e+37
      %v147 = vand.u32 %v120, 2147483648
      %v148 = vor.u32 1.1754944e-38, %v147
      %v149 = vsel %vm146, %v148, %v144
      %v150 = vmul.f32 %v116, %v149
      %v153 = vlaneseq
      %v154 = vand.u32 %v153, 127
      %v155 = vperm.slane %v135, %v154
      %v156 = vperm.slane %v150, %v154
      %vm157 = vcmask 1041409
      %v158 = vsel %vm157, %v156, %v155
      %vm160 = vcmask 25600
      %161 = vst.msk [vmem:[#allocation10] sm:$0x3] %vm160, %v158
    $region25: #{tpu_custom_call.1} parent=1 // pred_fallthru
      _
    // Predicated region
    $region26: #{tpu_custom_call.1} parent=1 // pred_check
      _
    $region27: #{tpu_custom_call.1} parent=1 // pred_check_branch
      %163 = sbr.rel (0) target = $region29
    $region28: #{tpu_custom_call.1} parent=1 // pred_region
      %165 = vsyncadd [#allocation7], 0
      %s167 = sshll.u32 [#allocation10], 4
      %s168 = int_to_ptr.vmem [resolvable:$true] %s167
      %s169 = sshll.u32 %s2, 4
      %s170 = int_to_ptr.hbm [resolvable:$true] %s169
      %172 = dma.vmem_to_hbm [thread:$0]  %s168, 32, %s170, [#allocation7]
    $region29: #{tpu_custom_call.1} parent=1 // pred_fallthru
      _
    // Predicated region
    $region30: #{tpu_custom_call.1} parent=1 // pred_check
      _
    $region31: #{tpu_custom_call.1} parent=1 // pred_check_branch
      %174 = sbr.rel (0) target = $region33
    $region32: #{tpu_custom_call.1} parent=1 // pred_region
      %176 = dma.done [#allocation7], 32
    $region33: #{tpu_custom_call.1} parent=1 // pred_fallthru
      _
    %177 = vsyncpa [#allocation6], 1
    %178 = vsyncpa [#allocation9], 1
    %179 = vsyncpa [#allocation7], 1

</llo_original>
